<compile_context>
chip_gen: v5e
topology: v5e:2x2
jax: 0.10.0
libtpu: 0.0.40
codegen_flags: <defaults>
</compile_context>

<pallas_src>
import functools

import jax
import jax.numpy as jnp
from jax.experimental import pallas as pl
from jax.experimental.pallas import tpu as pltpu

_LANE = 128
_SUBLANE_BF16 = 16


def _round_up(x, m):
    return ((x + m - 1) // m) * m


def _actor_kernel(x_ref, w1_ref, b1_ref, w2_ref, b2_ref, w3_ref, b3_ref,
                  o_ref, *, action_range):
    """One batch tile of Actor.forward (use_norm=False).

    h1 = relu(x @ W1 + b1)
    h2 = relu(h1 @ W2 + b2)
    y  = tanh(h2 @ W3 + b3) * action_range      # W3/b3 lane-padded to 128 cols
    Matmuls run in bf16 on the MXU with f32 accumulation; the pointwise tail
    (bias, ReLU, tanh, scale) stays in f32 on the VPU/EUP.
    """
    h1 = jnp.dot(x_ref[...], w1_ref[...], preferred_element_type=jnp.float32)
    h1 = jnp.maximum(h1 + b1_ref[...], 0.0)

    h2 = jnp.dot(h1.astype(jnp.bfloat16), w2_ref[...],
                 preferred_element_type=jnp.float32)
    h2 = jnp.maximum(h2 + b2_ref[...], 0.0)

    y = jnp.dot(h2.astype(jnp.bfloat16), w3_ref[...],
                preferred_element_type=jnp.float32) + b3_ref[...]
    o_ref[...] = (jnp.tanh(y) * action_range).astype(o_ref.dtype)


@functools.partial(jax.jit, static_argnames=("action_range", "batch_tile"))
def actor_forward(x, params, *, action_range, batch_tile=128):
    """Pallas-backed Actor.forward(x) with use_norm=False."""
    w1, b1, w2, b2, w3, b3 = params
    B, S = x.shape
    F1 = w1.shape[1]
    F2 = w2.shape[1]
    A = w3.shape[1]

    # Batch tile: multiple of the bf16 sublane pack (16); 128-512 preferred on
    # real workloads so the grid has many steps. Batch is padded, never asserted.
    tb = _round_up(min(int(batch_tile), _round_up(B, _SUBLANE_BF16)),
                   _SUBLANE_BF16)
    B_pad = _round_up(B, tb)
    n_steps = B_pad // tb

    # Lane-dense output: pad the (tiny) action head to a full 128-lane row so
    # the final matmul + stores are unmasked; extra columns are zero and sliced.
    Ap = _round_up(A, _LANE)

    if B_pad != B:
        x = jnp.pad(x, ((0, B_pad - B), (0, 0)))

    x_bf = x.astype(jnp.bfloat16)
    w1_bf = w1.astype(jnp.bfloat16)
    w2_bf = w2.astype(jnp.bfloat16)
    w3_bf = jnp.pad(w3, ((0, 0), (0, Ap - A))).astype(jnp.bfloat16)
    b1_f = b1.reshape(1, F1).astype(jnp.float32)
    b2_f = b2.reshape(1, F2).astype(jnp.float32)
    b3_f = jnp.pad(b3.reshape(1, A), ((0, 0), (0, Ap - A))).astype(jnp.float32)

    batch_map = lambda i: (i, 0)
    weight_map = lambda i: (0, 0)

    # VMEM budget (explicit, re-derived for v7x's 64 MiB physical VMEM).
    w_bytes = (S * F1 + F1 * F2 + F2 * Ap) * 2 + (F1 + F2 + Ap) * 4
    stream_bytes = 2 * (tb * S * 2 + tb * Ap * 4)   # double-buffered x / out tiles
    live_bytes = tb * (F1 + F2 + Ap) * 4            # in-flight f32 activations
    vmem_limit = int(min(max(2 * (2 * w_bytes + stream_bytes + live_bytes),
                             8 << 20), 40 << 20))

    cost = pl.CostEstimate(
        flops=2 * B_pad * (S * F1 + F1 * F2 + F2 * Ap),
        transcendentals=B_pad * Ap,                  # tanh
        bytes_accessed=B_pad * S * 2 + n_steps * w_bytes + B_pad * Ap * 4,
    )

    kernel = functools.partial(_actor_kernel, action_range=float(action_range))

    out = pl.pallas_call(
        kernel,
        out_shape=jax.ShapeDtypeStruct((B_pad, Ap), jnp.float32),
        grid_spec=pltpu.PrefetchScalarGridSpec(
            num_scalar_prefetch=0,
            grid=(n_steps,),
            in_specs=[
                pl.BlockSpec((tb, S), batch_map),     # x tile (streamed)
                pl.BlockSpec((S, F1), weight_map),    # W1
                pl.BlockSpec((1, F1), weight_map),    # b1
                pl.BlockSpec((F1, F2), weight_map),   # W2
                pl.BlockSpec((1, F2), weight_map),    # b2
                pl.BlockSpec((F2, Ap), weight_map),   # W3 (lane-padded)
                pl.BlockSpec((1, Ap), weight_map),    # b3 (lane-padded)
            ],
            out_specs=pl.BlockSpec((tb, Ap), batch_map),
        ),
        compiler_params=pltpu.CompilerParams(
            dimension_semantics=("parallel",),
            vmem_limit_bytes=vmem_limit,
        ),
        cost_estimate=cost,
    )(x_bf, w1_bf, b1_f, w2_bf, b2_f, w3_bf, b3_f)

    return out[:B, :A]


def init_actor_params(key, state_size, action_size, fc1_units=256, fc2_units=256):
    """Deterministic init mirroring Actor.__init__/reset().

    PyTorch stores Linear weights as (out, in); we store them transposed as
    (in, out).  _hidden_init uses weight.size()[0] == out_features, so the
    uniform limit is 1/sqrt(fc1_units) / 1/sqrt(fc2_units) for fc1/fc2 and
    0.003 for fc3.  Biases keep PyTorch's default Linear-bias range
    (+-1/sqrt(in_features)).
    """
    ks = jax.random.split(key, 6)
    lim1 = 1.0 / (fc1_units ** 0.5)
    lim2 = 1.0 / (fc2_units ** 0.5)
    lim3 = 0.003
    blim1 = 1.0 / (state_size ** 0.5)
    blim2 = 1.0 / (fc1_units ** 0.5)
    blim3 = 1.0 / (fc2_units ** 0.5)

    w1 = jax.random.uniform(ks[0], (state_size, fc1_units), jnp.float32, -lim1, lim1)
    b1 = jax.random.uniform(ks[1], (1, fc1_units), jnp.float32, -blim1, blim1)
    w2 = jax.random.uniform(ks[2], (fc1_units, fc2_units), jnp.float32, -lim2, lim2)
    b2 = jax.random.uniform(ks[3], (1, fc2_units), jnp.float32, -blim2, blim2)
    w3 = jax.random.uniform(ks[4], (fc2_units, action_size), jnp.float32, -lim3, lim3)
    b3 = jax.random.uniform(ks[5], (1, action_size), jnp.float32, -blim3, blim3)
    return (w1, b1, w2, b2, w3, b3)


def actor_reference(x, params, action_range, *, cast_bf16=True):
    """Pure-JAX reference of Actor.forward (use_norm=False)."""
    w1, b1, w2, b2, w3, b3 = params
    cast = (lambda a: a.astype(jnp.bfloat16)) if cast_bf16 else (lambda a: a)
    h1 = jax.nn.relu(
        jnp.dot(cast(x), cast(w1), preferred_element_type=jnp.float32) + b1)
    h2 = jax.nn.relu(
        jnp.dot(cast(h1), cast(w2), preferred_element_type=jnp.float32) + b2)
    y = jnp.dot(cast(h2), cast(w3), preferred_element_type=jnp.float32) + b3
    return jnp.tanh(y) * action_range


if __name__ == "__main__":
    # Small, module-consistent shapes.  Batch 40 is deliberately NOT a multiple
    # of the tile to exercise the padded / ragged path.
    B, STATE, ACTION = 40, 32, 4
    FC1, FC2 = 128, 128
    ACTION_RANGE = 2.0

    key = jax.random.PRNGKey(0)
    kp, kx = jax.random.split(key)

    params = init_actor_params(kp, STATE, ACTION, FC1, FC2)
    x = jax.random.normal(kx, (B, STATE), jnp.float32)

    # Multi-step grid (tb=16 -> padded batch 48, 3 grid steps) exercises the
    # pipelined path; the default batch_tile=128 is intended for real batches.
    out = actor_forward(x, params, action_range=ACTION_RANGE, batch_tile=16)
    out = jax.block_until_ready(out)

    out_default = actor_forward(x, params, action_range=ACTION_RANGE)
    out_default = jax.block_until_ready(out_default)

    ref_bf16 = actor_reference(x, params, ACTION_RANGE, cast_bf16=True)
    ref_f32 = actor_reference(x, params, ACTION_RANGE, cast_bf16=False)

    assert out.shape == (B, ACTION)
    assert out_default.shape == (B, ACTION)
    # Kernel matches a bf16-cast reference tightly ...
    assert jnp.allclose(out, ref_bf16, atol=5e-3, rtol=1e-2)
    assert jnp.allclose(out_default, ref_bf16, atol=5e-3, rtol=1e-2)
    # ... and the full-f32 reference within bf16 precision.
    assert jnp.allclose(out, ref_f32, atol=2e-2, rtol=5e-2)

    print("KERNEL_OK")
</pallas_src>

<mosaic_0001>
module attributes {stable_mosaic.version = 11 : i64} {
  func.func @_actor_kernel(%arg0: i32, %arg1: memref<16x32xbf16, #tpu.memory_space<vmem>>, %arg2: memref<32x128xbf16, #tpu.memory_space<vmem>>, %arg3: memref<1x128xf32, #tpu.memory_space<vmem>>, %arg4: memref<128x128xbf16, #tpu.memory_space<vmem>>, %arg5: memref<1x128xf32, #tpu.memory_space<vmem>>, %arg6: memref<128x128xbf16, #tpu.memory_space<vmem>>, %arg7: memref<1x128xf32, #tpu.memory_space<vmem>>, %arg8: memref<16x128xf32, #tpu.memory_space<vmem>>) attributes {dimension_semantics = [#tpu.dimension_semantics<parallel>], iteration_bounds = array<i64: 3>, scalar_prefetch = 0 : i64, scratch_operands = 0 : i64, tpu.core_type = #tpu.core_type<tc>, window_params = [{transform_indices = @transform_0, window_bounds = array<i64: 16, 32>}, {pipeline_mode = #tpu.pipeline_mode<synchronous>, transform_indices = @transform_1, window_bounds = array<i64: 32, 128>}, {pipeline_mode = #tpu.pipeline_mode<synchronous>, transform_indices = @transform_2, window_bounds = array<i64: 1, 128>}, {pipeline_mode = #tpu.pipeline_mode<synchronous>, transform_indices = @transform_3, window_bounds = array<i64: 128, 128>}, {pipeline_mode = #tpu.pipeline_mode<synchronous>, transform_indices = @transform_4, window_bounds = array<i64: 1, 128>}, {pipeline_mode = #tpu.pipeline_mode<synchronous>, transform_indices = @transform_5, window_bounds = array<i64: 128, 128>}, {pipeline_mode = #tpu.pipeline_mode<synchronous>, transform_indices = @transform_6, window_bounds = array<i64: 1, 128>}, {transform_indices = @transform_7, window_bounds = array<i64: 16, 128>}]} {
    %c0 = arith.constant 0 : index
    %c0_0 = arith.constant 0 : index
    %0 = vector.load %arg1[%c0, %c0_0] : memref<16x32xbf16, #tpu.memory_space<vmem>>, vector<16x32xbf16>
    %c0_1 = arith.constant 0 : index
    %c0_2 = arith.constant 0 : index
    %1 = vector.load %arg2[%c0_1, %c0_2] : memref<32x128xbf16, #tpu.memory_space<vmem>>, vector<32x128xbf16>
    %cst = arith.constant dense<0.000000e+00> : vector<16x128xf32>
    %2 = tpu.matmul %0, %1, %cst {dimension_numbers = #tpu.dot_dimension_numbers<[1], [0], [0], [1], [0, 0, 1, 1], [], []>} : vector<16x32xbf16>, vector<32x128xbf16>, vector<16x128xf32> -> vector<16x128xf32>
    %c0_3 = arith.constant 0 : index
    %c0_4 = arith.constant 0 : index
    %3 = vector.load %arg3[%c0_3, %c0_4] : memref<1x128xf32, #tpu.memory_space<vmem>>, vector<1x128xf32>
    %4 = vector.broadcast %3 : vector<1x128xf32> to vector<16x128xf32>
    %5 = arith.addf %2, %4 : vector<16x128xf32>
    %cst_5 = arith.constant 0.000000e+00 : f32
    %6 = vector.broadcast %cst_5 : f32 to vector<16x128xf32>
    %7 = arith.maximumf %5, %6 : vector<16x128xf32>
    %8 = arith.truncf %7 : vector<16x128xf32> to vector<16x128xbf16>
    %c0_6 = arith.constant 0 : index
    %c0_7 = arith.constant 0 : index
    %9 = vector.load %arg4[%c0_6, %c0_7] : memref<128x128xbf16, #tpu.memory_space<vmem>>, vector<128x128xbf16>
    %cst_8 = arith.constant dense<0.000000e+00> : vector<16x128xf32>
    %10 = tpu.matmul %8, %9, %cst_8 {dimension_numbers = #tpu.dot_dimension_numbers<[1], [0], [0], [1], [0, 0, 1, 1], [], []>} : vector<16x128xbf16>, vector<128x128xbf16>, vector<16x128xf32> -> vector<16x128xf32>
    %c0_9 = arith.constant 0 : index
    %c0_10 = arith.constant 0 : index
    %11 = vector.load %arg5[%c0_9, %c0_10] : memref<1x128xf32, #tpu.memory_space<vmem>>, vector<1x128xf32>
    %12 = vector.broadcast %11 : vector<1x128xf32> to vector<16x128xf32>
    %13 = arith.addf %10, %12 : vector<16x128xf32>
    %cst_11 = arith.constant 0.000000e+00 : f32
    %14 = vector.broadcast %cst_11 : f32 to vector<16x128xf32>
    %15 = arith.maximumf %13, %14 : vector<16x128xf32>
    %16 = arith.truncf %15 : vector<16x128xf32> to vector<16x128xbf16>
    %c0_12 = arith.constant 0 : index
    %c0_13 = arith.constant 0 : index
    %17 = vector.load %arg6[%c0_12, %c0_13] : memref<128x128xbf16, #tpu.memory_space<vmem>>, vector<128x128xbf16>
    %cst_14 = arith.constant dense<0.000000e+00> : vector<16x128xf32>
    %18 = tpu.matmul %16, %17, %cst_14 {dimension_numbers = #tpu.dot_dimension_numbers<[1], [0], [0], [1], [0, 0, 1, 1], [], []>} : vector<16x128xbf16>, vector<128x128xbf16>, vector<16x128xf32> -> vector<16x128xf32>
    %c0_15 = arith.constant 0 : index
    %c0_16 = arith.constant 0 : index
    %19 = vector.load %arg7[%c0_15, %c0_16] : memref<1x128xf32, #tpu.memory_space<vmem>>, vector<1x128xf32>
    %20 = vector.broadcast %19 : vector<1x128xf32> to vector<16x128xf32>
    %21 = arith.addf %18, %20 : vector<16x128xf32>
    %22 = math.tanh %21 : vector<16x128xf32>
    %cst_17 = arith.constant 2.000000e+00 : f32
    %23 = vector.broadcast %cst_17 : f32 to vector<16x128xf32>
    %24 = arith.mulf %22, %23 : vector<16x128xf32>
    %c0_18 = arith.constant 0 : index
    %c0_19 = arith.constant 0 : index
    %25 = vector.load %arg8[%c0_18, %c0_19] : memref<16x128xf32, #tpu.memory_space<vmem>>, vector<16x128xf32>
    tpu.vector_store %arg8[%c0_18, %c0_19], %24 {strides = array<i32>} : memref<16x128xf32, #tpu.memory_space<vmem>>, vector<16x128xf32>,
    return
  }
  func.func @transform_0(%arg0: i32) -> (i32, i32) {
    %c0_i32 = arith.constant 0 : i32
    %c0_i32_0 = arith.constant 0 : i32
    return %arg0, %c0_i32 : i32, i32
  }
  func.func @transform_1(%arg0: i32) -> (i32, i32) {
    %c0_i32 = arith.constant 0 : i32
    %c0_i32_0 = arith.constant 0 : i32
    %c0_i32_1 = arith.constant 0 : i32
    return %c0_i32, %c0_i32_0 : i32, i32
  }
  func.func @transform_2(%arg0: i32) -> (i32, i32) {
    %c0_i32 = arith.constant 0 : i32
    %c0_i32_0 = arith.constant 0 : i32
    %c0_i32_1 = arith.constant 0 : i32
    return %c0_i32, %c0_i32_0 : i32, i32
  }
  func.func @transform_3(%arg0: i32) -> (i32, i32) {
    %c0_i32 = arith.constant 0 : i32
    %c0_i32_0 = arith.constant 0 : i32
    %c0_i32_1 = arith.constant 0 : i32
    return %c0_i32, %c0_i32_0 : i32, i32
  }
  func.func @transform_4(%arg0: i32) -> (i32, i32) {
    %c0_i32 = arith.constant 0 : i32
    %c0_i32_0 = arith.constant 0 : i32
    %c0_i32_1 = arith.constant 0 : i32
    return %c0_i32, %c0_i32_0 : i32, i32
  }
  func.func @transform_5(%arg0: i32) -> (i32, i32) {
    %c0_i32 = arith.constant 0 : i32
    %c0_i32_0 = arith.constant 0 : i32
    %c0_i32_1 = arith.constant 0 : i32
    return %c0_i32, %c0_i32_0 : i32, i32
  }
  func.func @transform_6(%arg0: i32) -> (i32, i32) {
    %c0_i32 = arith.constant 0 : i32
    %c0_i32_0 = arith.constant 0 : i32
    %c0_i32_1 = arith.constant 0 : i32
    return %c0_i32, %c0_i32_0 : i32, i32
  }
  func.func @transform_7(%arg0: i32) -> (i32, i32) {
    %c0_i32 = arith.constant 0 : i32
    %c0_i32_0 = arith.constant 0 : i32
    return %arg0, %c0_i32 : i32, i32
  }
}

</mosaic_0001>

<llo_original>
// kernel: actor_forward.1
$region0: #{actor_forward.1}
  #allocation0 [shape = 'u32[]', space=smem, size = 0x4, offset = 0x4, fixed_abs, tag = 'smem constant byte address 0x4 - core index']
  #allocation1 [shape = 'u32[72,128]{1,0:T(1,128)}', space=vmem, size = 0x9000, scoped, tag = 'internal scratch']
  %s0 = inlined_call_operand.vmem [shape: bf16[48,32], index: 0, kind: input, shape index: {}]
  %s1 = inlined_call_operand.vmem [shape: bf16[32,128], index: 1, kind: input, shape index: {}]
  %s2 = inlined_call_operand.vmem [shape: f32[1,128], index: 2, kind: input, shape index: {}]
  %s3 = inlined_call_operand.vmem [shape: bf16[128,128], index: 3, kind: input, shape index: {}]
  %s4 = inlined_call_operand.vmem [shape: f32[1,128], index: 4, kind: input, shape index: {}]
  %s5 = inlined_call_operand.vmem [shape: bf16[128,128], index: 5, kind: input, shape index: {}]
  %s6 = inlined_call_operand.vmem [shape: f32[1,128], index: 6, kind: input, shape index: {}]
  %s7 = inlined_call_operand.vmem [shape: f32[48,128], index: 7, kind: output, shape index: {}]
  %s8 = sld [smem:[#allocation0]]
  $region61: #{actor_forward.1} parent=0
    _
  %s10 = ssub.s32 1, %s8
  %s11 = scalar_select 0, %s10, %s8
  loop: start=0, step=1, limit=5
  $region2: #{actor_forward.1} parent=0 // loop_pre_header
    _
  $region3: #{actor_forward.1} parent=0 // loop_header
    %s13 = sphi 0, %s17
    %p14 = scmp.ge.s32.totalorder %s13, 5
    %s23 = sphi 0, %s25
    %s26 = sphi 0, %s23
    %s27 = sphi 0, %s26
    %s43 = sphi 0, %s27
    %s47 = sphi 0, %s47
    %s49 = sphi 0, %s47
    %s50 = sphi 0, %s49
    %s64 = sphi 0, %s50
    %s68 = sphi 0, %s68
    %s70 = sphi 0, %s68
    %s71 = sphi 0, %s70
    %s85 = sphi 0, %s71
    %s89 = sphi 0, %s89
    %s91 = sphi 0, %s89
    %s92 = sphi 0, %s91
    %s106 = sphi 0, %s92
    %s110 = sphi 0, %s110
    %s112 = sphi 0, %s110
    %s113 = sphi 0, %s112
    %s127 = sphi 0, %s113
    %s131 = sphi 0, %s131
    %s133 = sphi 0, %s131
    %s134 = sphi 0, %s133
    %s148 = sphi 0, %s134
    %s152 = sphi 0, %s152
    %s154 = sphi 0, %s152
    %s155 = sphi 0, %s154
    %s169 = sphi 0, %s155
    %s175 = sphi 0, %s177
    %s178 = sphi 0, %s175
    %s179 = sphi 0, %s178
    %s195 = sphi 0, %s179
  $region4: #{actor_forward.1} parent=0 // loop_header_branch
    %16 = sbr.rel (%p14) target = $region8
  $region5: #{actor_forward.1} parent=0 // loop_body
    %s18 = ssub.s32 %s13, 1
    %s19 = ssub.s32 %s13, 2
    %s20 = sadd.s32 %s13, 1
    %s21 = ssub.s32 %s13, %s20
    %p22 = scmp.eq.s32.totalorder %s21, 0
    %s24 = sadd.s32 %s23, 1
    %s25 = scalar_select %p22, %s23, %s24
    %p28 = pneg %p22
    %p29 = scmp.eq.s32.totalorder %s13, 2
    %p30 = por %p28, %p29
    %p31 = scmp.ne.s32.totalorder %s23, %s26
    %p32 = scmp.eq.s32.totalorder %s13, 0
    %p33 = por %p31, %p32
    %p34 = scmp.ne.s32.totalorder %s23, %s26
    %p35 = scmp.eq.s32.totalorder %s18, 2
    %p36 = por %p34, %p35
    %p37 = scmp.ne.s32.totalorder %s26, %s27
    %p38 = scmp.eq.s32.totalorder %s18, 0
    %p39 = por %p37, %p38
    %p40 = scmp.ne.s32.totalorder %s26, %s27
    %p41 = scmp.eq.s32.totalorder %s19, 2
    %p42 = por %p40, %p41
    %p44 = scmp.ne.s32.totalorder %s27, %s43
    %p45 = scmp.eq.s32.totalorder %s19, 0
    %p46 = por %p44, %p45
    %s48 = sadd.s32 %s47, 1
    %p51 = scmp.eq.s32.totalorder %s13, 2
    %p52 = scmp.ne.s32.totalorder %s47, %s49
    %p53 = scmp.eq.s32.totalorder %s13, 0
    %p54 = por %p52, %p53
    %p55 = scmp.ne.s32.totalorder %s47, %s49
    %p56 = scmp.eq.s32.totalorder %s18, 2
    %p57 = por %p55, %p56
    %p58 = scmp.ne.s32.totalorder %s49, %s50
    %p59 = scmp.eq.s32.totalorder %s18, 0
    %p60 = por %p58, %p59
    %p61 = scmp.ne.s32.totalorder %s49, %s50
    %p62 = scmp.eq.s32.totalorder %s19, 2
    %p63 = por %p61, %p62
    %p65 = scmp.ne.s32.totalorder %s50, %s64
    %p66 = scmp.eq.s32.totalorder %s19, 0
    %p67 = por %p65, %p66
    %s69 = sadd.s32 %s68, 1
    %p72 = scmp.eq.s32.totalorder %s13, 2
    %p73 = scmp.ne.s32.totalorder %s68, %s70
    %p74 = scmp.eq.s32.totalorder %s13, 0
    %p75 = por %p73, %p74
    %p76 = scmp.ne.s32.totalorder %s68, %s70
    %p77 = scmp.eq.s32.totalorder %s18, 2
    %p78 = por %p76, %p77
    %p79 = scmp.ne.s32.totalorder %s70, %s71
    %p80 = scmp.eq.s32.totalorder %s18, 0
    %p81 = por %p79, %p80
    %p82 = scmp.ne.s32.totalorder %s70, %s71
    %p83 = scmp.eq.s32.totalorder %s19, 2
    %p84 = por %p82, %p83
    %p86 = scmp.ne.s32.totalorder %s71, %s85
    %p87 = scmp.eq.s32.totalorder %s19, 0
    %p88 = por %p86, %p87
    %s90 = sadd.s32 %s89, 1
    %p93 = scmp.eq.s32.totalorder %s13, 2
    %p94 = scmp.ne.s32.totalorder %s89, %s91
    %p95 = scmp.eq.s32.totalorder %s13, 0
    %p96 = por %p94, %p95
    %p97 = scmp.ne.s32.totalorder %s89, %s91
    %p98 = scmp.eq.s32.totalorder %s18, 2
    %p99 = por %p97, %p98
    %p100 = scmp.ne.s32.totalorder %s91, %s92
    %p101 = scmp.eq.s32.totalorder %s18, 0
    %p102 = por %p100, %p101
    %p103 = scmp.ne.s32.totalorder %s91, %s92
    %p104 = scmp.eq.s32.totalorder %s19, 2
    %p105 = por %p103, %p104
    %p107 = scmp.ne.s32.totalorder %s92, %s106
    %p108 = scmp.eq.s32.totalorder %s19, 0
    %p109 = por %p107, %p108
    %s111 = sadd.s32 %s110, 1
    %p114 = scmp.eq.s32.totalorder %s13, 2
    %p115 = scmp.ne.s32.totalorder %s110, %s112
    %p116 = scmp.eq.s32.totalorder %s13, 0
    %p117 = por %p115, %p116
    %p118 = scmp.ne.s32.totalorder %s110, %s112
    %p119 = scmp.eq.s32.totalorder %s18, 2
    %p120 = por %p118, %p119
    %p121 = scmp.ne.s32.totalorder %s112, %s113
    %p122 = scmp.eq.s32.totalorder %s18, 0
    %p123 = por %p121, %p122
    %p124 = scmp.ne.s32.totalorder %s112, %s113
    %p125 = scmp.eq.s32.totalorder %s19, 2
    %p126 = por %p124, %p125
    %p128 = scmp.ne.s32.totalorder %s113, %s127
    %p129 = scmp.eq.s32.totalorder %s19, 0
    %p130 = por %p128, %p129
    %s132 = sadd.s32 %s131, 1
    %p135 = scmp.eq.s32.totalorder %s13, 2
    %p136 = scmp.ne.s32.totalorder %s131, %s133
    %p137 = scmp.eq.s32.totalorder %s13, 0
    %p138 = por %p136, %p137
    %p139 = scmp.ne.s32.totalorder %s131, %s133
    %p140 = scmp.eq.s32.totalorder %s18, 2
    %p141 = por %p139, %p140
    %p142 = scmp.ne.s32.totalorder %s133, %s134
    %p143 = scmp.eq.s32.totalorder %s18, 0
    %p144 = por %p142, %p143
    %p145 = scmp.ne.s32.totalorder %s133, %s134
    %p146 = scmp.eq.s32.totalorder %s19, 2
    %p147 = por %p145, %p146
    %p149 = scmp.ne.s32.totalorder %s134, %s148
    %p150 = scmp.eq.s32.totalorder %s19, 0
    %p151 = por %p149, %p150
    %s153 = sadd.s32 %s152, 1
    %p156 = scmp.eq.s32.totalorder %s13, 2
    %p157 = scmp.ne.s32.totalorder %s152, %s154
    %p158 = scmp.eq.s32.totalorder %s13, 0
    %p159 = por %p157, %p158
    %p160 = scmp.ne.s32.totalorder %s152, %s154
    %p161 = scmp.eq.s32.totalorder %s18, 2
    %p162 = por %p160, %p161
    %p163 = scmp.ne.s32.totalorder %s154, %s155
    %p164 = scmp.eq.s32.totalorder %s18, 0
    %p165 = por %p163, %p164
    %p166 = scmp.ne.s32.totalorder %s154, %s155
    %p167 = scmp.eq.s32.totalorder %s19, 2
    %p168 = por %p166, %p167
    %p170 = scmp.ne.s32.totalorder %s155, %s169
    %p171 = scmp.eq.s32.totalorder %s19, 0
    %p172 = por %p170, %p171
    %s173 = ssub.s32 %s13, %s20
    %p174 = scmp.eq.s32.totalorder %s173, 0
    %s176 = sadd.s32 %s175, 1
    %s177 = scalar_select %p174, %s175, %s176
    %p180 = pneg %p174
    %p181 = scmp.eq.s32.totalorder %s13, 2
    %p182 = por %p180, %p181
    %p183 = scmp.ne.s32.totalorder %s175, %s178
    %p184 = scmp.eq.s32.totalorder %s13, 0
    %p185 = por %p183, %p184
    %p186 = scmp.ne.s32.totalorder %s175, %s178
    %p187 = scmp.eq.s32.totalorder %s18, 2
    %p188 = por %p186, %p187
    %p189 = scmp.ne.s32.totalorder %s178, %s179
    %p190 = scmp.eq.s32.totalorder %s18, 0
    %p191 = por %p189, %p190
    %p192 = scmp.ne.s32.totalorder %s178, %s179
    %p193 = scmp.eq.s32.totalorder %s19, 2
    %p194 = por %p192, %p193
    %p196 = scmp.ne.s32.totalorder %s179, %s195
    %p197 = scmp.eq.s32.totalorder %s19, 0
    %p198 = por %p196, %p197
    %p199 = scmp.le.s32.totalorder 1, %s13
    %p200 = scmp.lt.s32.totalorder %s13, 4
    %p201 = pnand %p199, %p200
    %p202 = pneg %p201
    // Predicated region
    $region9: #{actor_forward.1} parent=5 // pred_check
      _
    $region10: #{actor_forward.1} parent=5 // pred_check_branch
      %204 = sbr.rel (%p201) target = $region12
    $region11: #{actor_forward.1} parent=5 // pred_region
      %s205 = ssub.s32 %s13, 1
      // Predicated region
      $region13: #{actor_forward.1} parent=11 // pred_check
        %p206 = pneg %p60
      $region14: #{actor_forward.1} parent=11 // pred_check_branch
        %208 = sbr.rel (%p206) target = $region16
      $region15: #{actor_forward.1} parent=11 // pred_region
        _
      $region16: #{actor_forward.1} parent=11 // pred_fallthru
        _
      // Predicated region
      $region17: #{actor_forward.1} parent=11 // pred_check
        %p209 = pneg %p81
      $region18: #{actor_forward.1} parent=11 // pred_check_branch
        %211 = sbr.rel (%p209) target = $region20
      $region19: #{actor_forward.1} parent=11 // pred_region
        _
      $region20: #{actor_forward.1} parent=11 // pred_fallthru
        _
      // Predicated region
      $region21: #{actor_forward.1} parent=11 // pred_check
        %p212 = pneg %p102
      $region22: #{actor_forward.1} parent=11 // pred_check_branch
        %214 = sbr.rel (%p212) target = $region24
      $region23: #{actor_forward.1} parent=11 // pred_region
        _
      $region24: #{actor_forward.1} parent=11 // pred_fallthru
        _
      // Predicated region
      $region25: #{actor_forward.1} parent=11 // pred_check
        %p215 = pneg %p123
      $region26: #{actor_forward.1} parent=11 // pred_check_branch
        %217 = sbr.rel (%p215) target = $region28
      $region27: #{actor_forward.1} parent=11 // pred_region
        _
      $region28: #{actor_forward.1} parent=11 // pred_fallthru
        _
      // Predicated region
      $region29: #{actor_forward.1} parent=11 // pred_check
        %p218 = pneg %p144
      $region30: #{actor_forward.1} parent=11 // pred_check_branch
        %220 = sbr.rel (%p218) target = $region32
      $region31: #{actor_forward.1} parent=11 // pred_region
        _
      $region32: #{actor_forward.1} parent=11 // pred_fallthru
        _
      // Predicated region
      $region33: #{actor_forward.1} parent=11 // pred_check
        %p221 = pneg %p165
      $region34: #{actor_forward.1} parent=11 // pred_check_branch
        %223 = sbr.rel (%p221) target = $region36
      $region35: #{actor_forward.1} parent=11 // pred_region
        _
      $region36: #{actor_forward.1} parent=11 // pred_fallthru
        _
    $region12: #{actor_forward.1} parent=5 // pred_fallthru
      _
    %p224 = scmp.lt.s32.totalorder %s13, 3
    // Predicated region
    $region37: #{actor_forward.1} parent=5 // pred_check
      %p225 = pneg %p224
    $region38: #{actor_forward.1} parent=5 // pred_check_branch
      %227 = sbr.rel (%p225) target = $region40
    $region39: #{actor_forward.1} parent=5 // pred_region
      // Predicated region
      $region41: #{actor_forward.1} parent=39 // pred_check
        %p228 = pneg %p33
      $region42: #{actor_forward.1} parent=39 // pred_check_branch
        %230 = sbr.rel (%p228) target = $region44
      $region43: #{actor_forward.1} parent=39 // pred_region
        %s231 = smul.u32 2, %s13
        %p232 = scmp.lt.s32.totalorder %s231, 5
        %s233 = scalar_select %p232, %s231, 5
        %s234 = smul.addr %s233, 4
        %s235 = scalar_lea.vmem %s0, %s234
        %s236 = smul.u32 2, %s13
      $region44: #{actor_forward.1} parent=39 // pred_fallthru
        _
    $region40: #{actor_forward.1} parent=5 // pred_fallthru
      _
    %p237 = scmp.le.s32.totalorder 1, %s13
    %p238 = scmp.lt.s32.totalorder %s13, 4
    %p239 = pnand %p237, %p238
    %p240 = pneg %p239
    // Predicated region
    $region45: #{actor_forward.1} parent=5 // pred_check
      _
    $region46: #{actor_forward.1} parent=5 // pred_check_branch
      %242 = sbr.rel (%p239) target = $region48
    $region47: #{actor_forward.1} parent=5 // pred_region
      %s243 = ssub.s32 %s13, 1
      %s244 = smul.u32 2, %s18
      %p245 = scmp.lt.s32.totalorder %s244, 5
      %s246 = scalar_select %p245, %s244, 5
      %s247 = smul.addr %s246, 4
      %s248 = scalar_lea.vmem %s0, %s247
      %p249 = pneg %p39
      %p250 = pneg %p36
      %p251 = pneg %p60
      %p252 = pneg %p57
      %p253 = pneg %p81
      %p254 = pneg %p78
      %p255 = pneg %p102
      %p256 = pneg %p99
      %p257 = pneg %p123
      %p258 = pneg %p120
      %p259 = pneg %p144
      %p260 = pneg %p141
      %p261 = pneg %p165
      %p262 = pneg %p162
      %p263 = pneg %p191
      %p264 = pneg %p188
      %s265 = smul.u32 2, %s18
      %p266 = scmp.lt.s32.totalorder %s265, 5
      %s267 = scalar_select %p266, %s265, 5
      %s268 = smul.addr %s267, 8
      %s269 = scalar_lea.vmem %s7, %s268
      %s270 = smul.u32 2, %s18
      %p271 = scmp.lt.s32.totalorder %s270, 5
      %s272 = scalar_select %p271, %s270, 5
      %s273 = smul.addr %s272, 4
      %s274 = scalar_lea.vmem %s0, %s273
      %s275 = smul.u32 2, %s18
      %s276 = smul.u32 2, %s18
      %p277 = scmp.lt.s32.totalorder %s276, 5
      %s278 = scalar_select %p277, %s276, 5
      %s279 = smul.addr %s278, 8
      %s280 = scalar_lea.vmem %s7, %s279
      %s281 = smul.u32 2, %s18
      %v283 = vld [vmem:[%s274] sm:$0xf]
      %v284 = vld [vmem:[%s274 + $0x4] sm:$0xf]
      %v285 = vld [vmem:[%s1] sm:$0xf]
      %v286 = vld [vmem:[%s1 + $0x4] sm:$0xf]
      %v287 = vld [vmem:[%s1 + $0x8] sm:$0xf]
      %v288 = vld [vmem:[%s1 + $0xc] sm:$0xf]
      %v289 = vld [vmem:[%s2] sm:$0x1]
      %v291 = vperm.slane %v289, 0
      %v295 = vunpack.c.l.b16 %v283
      %v296 = vunpack.c.l.b16 %v284
      %v297 = vpack.c.b16 %v296, %v295
      %v302 = vunpack.c.l.b16 %v285
      %v303 = vunpack.c.l.b16 %v286
      %v304 = vunpack.c.l.b16 %v287
      %v305 = vunpack.c.l.b16 %v288
      %v306 = vpack.c.b16 %v303, %v302
      %v307 = vpack.c.b16 %v305, %v304
      %vm310 = vcmask 261120
      %v312 = vsel %vm310, %v297, 0
      %314 = vmatpush.bf16.msra.mxu0 0
      %315 = vmatpush.bf16.msra.mxu0 0
      %316 = vmatpush.bf16.msra.mxu0 0
      %317 = vmatpush.bf16.msra.mxu0 0
      %318 = vmatpush.bf16.msra.mxu0 0
      %319 = vmatpush.bf16.msra.mxu0 0
      %320 = vmatpush.bf16.msra.mxu0 %v307
      %321 = vmatpush.bf16.msra.mxu0 %v306
      %322 = vmatmul.bf16.gmra.mxu0 %v312
      %v323 = vpop.f32.mrf.mxu0
      %v324 = vadd.f32 %v291, %v323
      %v325 = vpop.f32.mrf.mxu0
      %v326 = vadd.f32 %v291, %v325
      %327 = vdwg.mxu0
      %v328 = vmax.f32 %v324, 0.0
      %v329 = vmax.f32 %v326, 0.0
      %v330 = vpack.c.bf16 %v329, %v328
      %v331 = vld [vmem:[%s3] sm:$0xf]
      %v332 = vld [vmem:[%s3 + $0x4] sm:$0xf]
      %v333 = vld [vmem:[%s3 + $0x8] sm:$0xf]
      %v334 = vld [vmem:[%s3 + $0xc] sm:$0xf]
      %v335 = vld [vmem:[%s3 + $0x10] sm:$0xf]
      %v336 = vld [vmem:[%s3 + $0x14] sm:$0xf]
      %v337 = vld [vmem:[%s3 + $0x18] sm:$0xf]
      %v338 = vld [vmem:[%s3 + $0x1c] sm:$0xf]
      %v339 = vld [vmem:[%s3 + $0x20] sm:$0xf]
      %v340 = vld [vmem:[%s3 + $0x24] sm:$0xf]
      %v341 = vld [vmem:[%s3 + $0x28] sm:$0xf]
      %v342 = vld [vmem:[%s3 + $0x2c] sm:$0xf]
      %v343 = vld [vmem:[%s3 + $0x30] sm:$0xf]
      %v344 = vld [vmem:[%s3 + $0x34] sm:$0xf]
      %v345 = vld [vmem:[%s3 + $0x38] sm:$0xf]
      %v346 = vld [vmem:[%s3 + $0x3c] sm:$0xf]
      %v347 = vld [vmem:[%s4] sm:$0x1]
      %v349 = vperm.slane %v347, 0
      %v367 = vunpack.c.l.b16 %v331
      %v368 = vunpack.c.l.b16 %v332
      %v369 = vunpack.c.l.b16 %v333
      %v370 = vunpack.c.l.b16 %v334
      %v371 = vunpack.c.l.b16 %v335
      %v372 = vunpack.c.l.b16 %v336
      %v373 = vunpack.c.l.b16 %v337
      %v374 = vunpack.c.l.b16 %v338
      %v375 = vunpack.c.l.b16 %v339
      %v376 = vunpack.c.l.b16 %v340
      %v377 = vunpack.c.l.b16 %v341
      %v378 = vunpack.c.l.b16 %v342
      %v379 = vunpack.c.l.b16 %v343
      %v380 = vunpack.c.l.b16 %v344
      %v381 = vunpack.c.l.b16 %v345
      %v382 = vunpack.c.l.b16 %v346
      %v383 = vpack.c.b16 %v368, %v367
      %v384 = vpack.c.b16 %v370, %v369
      %v385 = vpack.c.b16 %v372, %v371
      %v386 = vpack.c.b16 %v374, %v373
      %v387 = vpack.c.b16 %v376, %v375
      %v388 = vpack.c.b16 %v378, %v377
      %v389 = vpack.c.b16 %v380, %v379
      %v390 = vpack.c.b16 %v382, %v381
      %399 = vmatpush.bf16.msra.mxu0 %v390
      %400 = vmatpush.bf16.msra.mxu0 %v389
      %401 = vmatpush.bf16.msra.mxu0 %v388
      %402 = vmatpush.bf16.msra.mxu0 %v387
      %403 = vmatpush.bf16.msra.mxu0 %v386
      %404 = vmatpush.bf16.msra.mxu0 %v385
      %405 = vmatpush.bf16.msra.mxu0 %v384
      %406 = vmatpush.bf16.msra.mxu0 %v383
      %407 = vmatmul.bf16.gmra.mxu0 %v330
      %v408 = vpop.f32.mrf.mxu0
      %v409 = vadd.f32 %v349, %v408
      %v410 = vpop.f32.mrf.mxu0
      %v411 = vadd.f32 %v349, %v410
      %412 = vdwg.mxu0
      %v413 = vmax.f32 %v409, 0.0
      %v414 = vmax.f32 %v411, 0.0
      %v415 = vpack.c.bf16 %v414, %v413
      %v416 = vld [vmem:[%s5] sm:$0xf]
      %v417 = vld [vmem:[%s5 + $0x4] sm:$0xf]
      %v418 = vld [vmem:[%s5 + $0x8] sm:$0xf]
      %v419 = vld [vmem:[%s5 + $0xc] sm:$0xf]
      %v420 = vld [vmem:[%s5 + $0x10] sm:$0xf]
      %v421 = vld [vmem:[%s5 + $0x14] sm:$0xf]
      %v422 = vld [vmem:[%s5 + $0x18] sm:$0xf]
      %v423 = vld [vmem:[%s5 + $0x1c] sm:$0xf]
      %v424 = vld [vmem:[%s5 + $0x20] sm:$0xf]
      %v425 = vld [vmem:[%s5 + $0x24] sm:$0xf]
      %v426 = vld [vmem:[%s5 + $0x28] sm:$0xf]
      %v427 = vld [vmem:[%s5 + $0x2c] sm:$0xf]
      %v428 = vld [vmem:[%s5 + $0x30] sm:$0xf]
      %v429 = vld [vmem:[%s5 + $0x34] sm:$0xf]
      %v430 = vld [vmem:[%s5 + $0x38] sm:$0xf]
      %v431 = vld [vmem:[%s5 + $0x3c] sm:$0xf]
      %v432 = vld [vmem:[%s6] sm:$0x1]
      %v434 = vperm.slane %v432, 0
      %v452 = vunpack.c.l.b16 %v416
      %v453 = vunpack.c.l.b16 %v417
      %v454 = vunpack.c.l.b16 %v418
      %v455 = vunpack.c.l.b16 %v419
      %v456 = vunpack.c.l.b16 %v420
      %v457 = vunpack.c.l.b16 %v421
      %v458 = vunpack.c.l.b16 %v422
      %v459 = vunpack.c.l.b16 %v423
      %v460 = vunpack.c.l.b16 %v424
      %v461 = vunpack.c.l.b16 %v425
      %v462 = vunpack.c.l.b16 %v426
      %v463 = vunpack.c.l.b16 %v427
      %v464 = vunpack.c.l.b16 %v428
      %v465 = vunpack.c.l.b16 %v429
      %v466 = vunpack.c.l.b16 %v430
      %v467 = vunpack.c.l.b16 %v431
      %v468 = vpack.c.b16 %v453, %v452
      %v469 = vpack.c.b16 %v455, %v454
      %v470 = vpack.c.b16 %v457, %v456
      %v471 = vpack.c.b16 %v459, %v458
      %v472 = vpack.c.b16 %v461, %v460
      %v473 = vpack.c.b16 %v463, %v462
      %v474 = vpack.c.b16 %v465, %v464
      %v475 = vpack.c.b16 %v467, %v466
      %484 = vmatpush.bf16.msra.mxu0 %v475
      %485 = vmatpush.bf16.msra.mxu0 %v474
      %486 = vmatpush.bf16.msra.mxu0 %v473
      %487 = vmatpush.bf16.msra.mxu0 %v472
      %488 = vmatpush.bf16.msra.mxu0 %v471
      %489 = vmatpush.bf16.msra.mxu0 %v470
      %490 = vmatpush.bf16.msra.mxu0 %v469
      %491 = vmatpush.bf16.msra.mxu0 %v468
      %492 = vmatmul.bf16.gmra.mxu0 %v415
      %v493 = vpop.f32.mrf.mxu0
      %v494 = vadd.f32 %v434, %v493
      %v495 = vpop.f32.mrf.mxu0
      %v496 = vadd.f32 %v434, %v495
      %497 = vdwg.mxu0
      %v498 = vtanh.pop %v494
      %v499 = vtanh.pop %v496
      %v500 = vmul.f32 %v498, 2.0
      %v501 = vmul.f32 %v499, 2.0
      %502 = vst [vmem:[%s280] sm:$0xff] %v500
      %503 = vst [vmem:[%s280 + $0x8] sm:$0xff] %v501
      %s504 = smul.u32 2, %s18
      %p505 = scmp.lt.s32.totalorder %s504, 5
      %s506 = scalar_select %p505, %s504, 5
      %s507 = smul.addr %s506, 8
      %s508 = scalar_lea.vmem %s7, %s507
      // Predicated region
      $region49: #{actor_forward.1} parent=47 // pred_check
        %p509 = pneg %p188
      $region50: #{actor_forward.1} parent=47 // pred_check_branch
        %511 = sbr.rel (%p509) target = $region52
      $region51: #{actor_forward.1} parent=47 // pred_region
        %s512 = smul.u32 2, %s18
      $region52: #{actor_forward.1} parent=47 // pred_fallthru
        _
    $region48: #{actor_forward.1} parent=5 // pred_fallthru
      _
    %p513 = scmp.le.s32.totalorder 2, %s13
    // Predicated region
    $region53: #{actor_forward.1} parent=5 // pred_check
      %p514 = pneg %p513
    $region54: #{actor_forward.1} parent=5 // pred_check_branch
      %516 = sbr.rel (%p514) target = $region56
    $region55: #{actor_forward.1} parent=5 // pred_region
      %s517 = ssub.s32 %s13, 2
      // Predicated region
      $region57: #{actor_forward.1} parent=55 // pred_check
        %p518 = pneg %p194
      $region58: #{actor_forward.1} parent=55 // pred_check_branch
        %520 = sbr.rel (%p518) target = $region60
      $region59: #{actor_forward.1} parent=55 // pred_region
        %s521 = smul.u32 2, %s19
        %p522 = scmp.lt.s32.totalorder %s521, 5
        %s523 = scalar_select %p522, %s521, 5
        %s524 = smul.addr %s523, 8
        %s525 = scalar_lea.vmem %s7, %s524
      $region60: #{actor_forward.1} parent=55 // pred_fallthru
        _
    $region56: #{actor_forward.1} parent=5 // pred_fallthru
      _
  $region6: #{actor_forward.1} parent=0 // loop_footer
    %s17 = sadd.s32 1, %s13
  $region7: #{actor_forward.1} parent=0 // loop_footer_branch
    %12 = sbr.rel target = $region3
  $region8: #{actor_forward.1} parent=0 // loop_exit
    _

</llo_original>
